<compile_context>
chip_gen: v5e
topology: v5e:2x2
jax: 0.10.0
libtpu: 0.0.40
codegen_flags: <defaults>
</compile_context>

<pallas_src>
import functools

import jax
import jax.numpy as jnp
import numpy as np
from jax import lax
from jax.experimental import pallas as pl
from jax.experimental.pallas import tpu as pltpu

NEG_SLOPE = 0.01   # nn.LeakyReLU default
BN_EPS = 1e-5      # nn.BatchNorm1d default
LANE = 128
SUBLANE = 8


def _round_up(x, m):
    return (x + m - 1) // m * m


def _resblock_kernel(x_ref, w1_ref, w2_ref, ws_ref, b_ref, out_ref,
                     *, K, L, L8, Lp, B, pad_left, cin, cp):
    """One grid step processes B batch elements with one matmul per conv tap.

    x_ref  : (B, Lx, cin)  channels-last input, zero-padded so that
                           x_ref[b, j, c] = x[b, j - 2*pad_left, c] (0 outside [0, L)),
                           with Lx = Lp + K - 1.
    w1_ref : (K, cin, cp)  conv1 per-tap weights, BN1 scale folded, lanes padded to cp
    w2_ref : (K, cp,  cp)  conv2 per-tap weights, BN2 scale folded
    ws_ref : (cin, cp)     1x1 shortcut weights
    b_ref  : (3, cp)       row0 = folded bias1, row1 = folded bias2, row2 = shortcut bias
    out_ref: (B, L8, cp)   lane-dense output
    """
    b1 = b_ref[0:1, :]
    b2 = b_ref[1:2, :]
    bs = b_ref[2:3, :]

    # ---- conv1 + BN1(folded) + LeakyReLU: K accumulate-dots over B*Lp rows ----
    h = jnp.dot(x_ref[:, 0:Lp, :].reshape(B * Lp, cin), w1_ref[0],
                preferred_element_type=jnp.float32)
    for k in range(1, K):                                   # K small, static unroll
        h += jnp.dot(x_ref[:, k:k + Lp, :].reshape(B * Lp, cin), w1_ref[k],
                     preferred_element_type=jnp.float32)
    h += b1
    h = jnp.maximum(h, NEG_SLOPE * h)
    # TODO(synk): Dropout(0.1) identity (eval-mode semantics).

    # Zero the halo rows (conv1 positions outside [0, L)) so they act as conv2's
    # zero padding; per-batch row index lives on axis 1 after the reshape.
    h = h.reshape(B, Lp, cp)
    ridx = lax.broadcasted_iota(jnp.int32, (B, Lp, cp), 1)
    h = jnp.where((ridx >= pad_left) & (ridx < pad_left + L), h, 0.0)

    # ---- conv2 + BN2(folded) + LeakyReLU: K per-tap (cp, cp) accumulate-dots ----
    y = jnp.dot(h[:, 0:L8, :].reshape(B * L8, cp), w2_ref[0],
                preferred_element_type=jnp.float32)
    for k in range(1, K):
        y += jnp.dot(h[:, k:k + L8, :].reshape(B * L8, cp), w2_ref[k],
                     preferred_element_type=jnp.float32)
    y += b2
    y = jnp.maximum(y, NEG_SLOPE * y)
    # TODO(synk): second Dropout(0.1) identity (eval-mode semantics).

    # ---- shortcut 1x1 conv on the raw (unshifted) input rows ----
    xc = x_ref[:, 2 * pad_left:2 * pad_left + L8, :].reshape(B * L8, cin)
    sc = jnp.dot(xc, ws_ref[...], preferred_element_type=jnp.float32) + bs

    out_ref[...] = (y + sc).reshape(B, L8, cp).astype(out_ref.dtype)


def residual_block_forward(x_ncl, params, kernel_size, *, batch_block=128):
    """x_ncl: (N, C_in, L) float32, PyTorch NCL layout. Returns (N, C_out, L)."""
    N, cin, L = x_ncl.shape
    K = kernel_size
    cout = params["w1"].shape[0]

    pad_total = K - 1                     # PyTorch padding='same', stride=1
    pad_left = pad_total // 2

    L8 = _round_up(L, SUBLANE)            # sublane-aligned output rows
    Lp = _round_up(L8 + K - 1, SUBLANE)   # conv1 evaluated at extended positions
    Lx = Lp + K - 1                       # padded input rows per batch element
    cp = _round_up(cout, LANE)            # lane-dense channel dim

    # Batch tile: big enough to amortize the ~0.35us/step overhead, but keep >= 2
    # grid steps whenever possible so v7x's two TensorCores both get work.
    B = max(1, min(batch_block, N))
    if N > 1:
        B = min(B, (N + 1) // 2)
    N_pad = _round_up(N, B)

    # ---- layout glue (plain JAX): channels-last, zero-pad the halo once ----
    x_nlc = jnp.transpose(x_ncl, (0, 2, 1)).astype(jnp.float32)     # (N, L, cin)
    x_nlc = jnp.pad(x_nlc, ((0, N_pad - N), (0, 0), (0, 0)))
    left = 2 * pad_left
    x_pad = jnp.pad(x_nlc, ((0, 0), (left, Lx - left - L), (0, 0)))  # (N_pad, Lx, cin)

    # ---- fold BatchNorm (eval) into conv weights / biases ----
    def bn_fold(g, be, m, v):
        s = g / jnp.sqrt(v + BN_EPS)
        return s, be - m * s

    s1, t1 = bn_fold(params["g1"], params["be1"], params["m1"], params["v1"])
    s2, t2 = bn_fold(params["g2"], params["be2"], params["m2"], params["v2"])

    def pad_c(a):   # zero-pad last dim cout -> cp
        return jnp.pad(a, [(0, 0)] * (a.ndim - 1) + [(0, cp - cout)])

    # conv1: (cout, cin, K) -> (K, cin, cp), BN1 scale folded
    w1_f = pad_c(jnp.transpose(params["w1"], (2, 1, 0)) * s1[None, None, :])
    # conv2: (cout, cout, K) -> (K, cp, cp); input channels zero-padded to cp
    w2 = jnp.transpose(params["w2"], (2, 1, 0)) * s2[None, None, :]   # (K, cout, cout)
    w2_f = pad_c(jnp.pad(w2, ((0, 0), (0, cp - cout), (0, 0))))       # (K, cp, cp)
    # shortcut 1x1: (cout, cin, 1) -> (cin, cp)
    ws_f = pad_c(jnp.transpose(params["ws"][:, :, 0], (1, 0)))

    bias1 = pad_c(params["b1"] * s1 + t1)
    bias2 = pad_c(params["b2"] * s2 + t2)
    bias_s = pad_c(params["bs"])
    bvec = jnp.stack([bias1, bias2, bias_s], axis=0)                  # (3, cp)

    kernel = functools.partial(_resblock_kernel, K=K, L=L, L8=L8, Lp=Lp,
                               B=B, pad_left=pad_left, cin=cin, cp=cp)

    def full_spec(a):
        nd = a.ndim
        return pl.BlockSpec(a.shape, lambda n, _nd=nd: (0,) * _nd)

    # Explicit VMEM budget: double-buffered I/O blocks + weights + live f32
    # intermediates, clamped to v7x's 64 MiB physical per-TC VMEM.
    blk_bytes = 4 * (2 * B * Lx * cin + 2 * B * L8 * cp)
    itm_bytes = 4 * (2 * B * Lp * cp + 2 * B * L8 * cp)
    w_bytes = 4 * (K * cin * cp + K * cp * cp + cin * cp + 3 * cp)
    vmem_limit = int(min(64 * 1024 * 1024,
                         max(32 * 1024 * 1024,
                             2 * (blk_bytes + itm_bytes + w_bytes))))

    out = pl.pallas_call(
        kernel,
        out_shape=jax.ShapeDtypeStruct((N_pad, L8, cp), jnp.float32),
        grid=(N_pad // B,),
        in_specs=[
            pl.BlockSpec((B, Lx, cin), lambda n: (n, 0, 0)),
            full_spec(w1_f), full_spec(w2_f), full_spec(ws_f), full_spec(bvec),
        ],
        out_specs=pl.BlockSpec((B, L8, cp), lambda n: (n, 0, 0)),
        compiler_params=pltpu.CompilerParams(
            dimension_semantics=("parallel",),
            vmem_limit_bytes=vmem_limit),
    )(x_pad, w1_f, w2_f, ws_f, bvec)

    # slice off padding, back to PyTorch NCL
    return jnp.transpose(out[:N, :L, :cout], (0, 2, 1))


def reference_forward(x, params, kernel_size):
    """Pure-JAX (lax.conv) reference in PyTorch NCL layout, eval-mode BN/Dropout."""
    K = kernel_size
    pad_total = K - 1
    same_pad = (pad_total // 2, pad_total - pad_total // 2)

    def conv1d(x, w, b, padding):
        y = jax.lax.conv_general_dilated(
            x, w, window_strides=(1,), padding=[padding],
            dimension_numbers=("NCW", "OIW", "NCW"))
        return y + b[None, :, None]

    def bn(y, g, be, m, v):
        return ((y - m[None, :, None]) / jnp.sqrt(v[None, :, None] + BN_EPS)
                * g[None, :, None] + be[None, :, None])

    lrelu = lambda y: jnp.where(y >= 0, y, NEG_SLOPE * y)

    h = lrelu(bn(conv1d(x, params["w1"], params["b1"], same_pad),
                 params["g1"], params["be1"], params["m1"], params["v1"]))
    h = lrelu(bn(conv1d(h, params["w2"], params["b2"], same_pad),
                 params["g2"], params["be2"], params["m2"], params["v2"]))
    sc = conv1d(x, params["ws"], params["bs"], (0, 0))
    return h + sc


if __name__ == "__main__":
    N, CIN, COUT, L, K = 2, 4, 8, 16, 3

    key = jax.random.PRNGKey(0)
    ks = jax.random.split(key, 16)
    params = dict(
        w1=0.1 * jax.random.normal(ks[0], (COUT, CIN, K), jnp.float32),
        b1=0.1 * jax.random.normal(ks[1], (COUT,), jnp.float32),
        g1=1.0 + 0.1 * jax.random.normal(ks[2], (COUT,), jnp.float32),
        be1=0.1 * jax.random.normal(ks[3], (COUT,), jnp.float32),
        m1=0.1 * jax.random.normal(ks[4], (COUT,), jnp.float32),
        v1=1.0 + 0.1 * jnp.abs(jax.random.normal(ks[5], (COUT,), jnp.float32)),
        w2=0.1 * jax.random.normal(ks[6], (COUT, COUT, K), jnp.float32),
        b2=0.1 * jax.random.normal(ks[7], (COUT,), jnp.float32),
        g2=1.0 + 0.1 * jax.random.normal(ks[8], (COUT,), jnp.float32),
        be2=0.1 * jax.random.normal(ks[9], (COUT,), jnp.float32),
        m2=0.1 * jax.random.normal(ks[10], (COUT,), jnp.float32),
        v2=1.0 + 0.1 * jnp.abs(jax.random.normal(ks[11], (COUT,), jnp.float32)),
        ws=0.1 * jax.random.normal(ks[12], (COUT, CIN, 1), jnp.float32),
        bs=0.1 * jax.random.normal(ks[13], (COUT,), jnp.float32),
    )
    x = jax.random.normal(ks[15], (N, CIN, L), jnp.float32)

    out = residual_block_forward(x, params, K)
    out = jax.block_until_ready(out)
    assert out.shape == (N, COUT, L), out.shape

    ref = reference_forward(x, params, K)
    np.testing.assert_allclose(np.asarray(out), np.asarray(ref),
                               rtol=1e-5, atol=1e-5)
    print("KERNEL_OK")
</pallas_src>

<mosaic_0001>
module attributes {stable_mosaic.version = 11 : i64} {
  func.func @_resblock_kernel(%arg0: i32, %arg1: memref<1x26x4xf32, #tpu.memory_space<vmem>>, %arg2: memref<3x4x128xf32, #tpu.memory_space<vmem>>, %arg3: memref<3x128x128xf32, #tpu.memory_space<vmem>>, %arg4: memref<4x128xf32, #tpu.memory_space<vmem>>, %arg5: memref<3x128xf32, #tpu.memory_space<vmem>>, %arg6: memref<1x16x128xf32, #tpu.memory_space<vmem>>) attributes {dimension_semantics = [#tpu.dimension_semantics<parallel>], iteration_bounds = array<i64: 2>, scalar_prefetch = 0 : i64, scratch_operands = 0 : i64, tpu.core_type = #tpu.core_type<tc>, window_params = [{transform_indices = @transform_0, window_bounds = array<i64: 1, 26, 4>}, {pipeline_mode = #tpu.pipeline_mode<synchronous>, transform_indices = @transform_1, window_bounds = array<i64: 3, 4, 128>}, {pipeline_mode = #tpu.pipeline_mode<synchronous>, transform_indices = @transform_2, window_bounds = array<i64: 3, 128, 128>}, {pipeline_mode = #tpu.pipeline_mode<synchronous>, transform_indices = @transform_3, window_bounds = array<i64: 4, 128>}, {pipeline_mode = #tpu.pipeline_mode<synchronous>, transform_indices = @transform_4, window_bounds = array<i64: 3, 128>}, {transform_indices = @transform_5, window_bounds = array<i64: 1, 16, 128>}]} {
    %c0 = arith.constant 0 : index
    %c0_0 = arith.constant 0 : index
    %0 = vector.load %arg5[%c0, %c0_0] : memref<3x128xf32, #tpu.memory_space<vmem>>, vector<1x128xf32>
    %c1 = arith.constant 1 : index
    %c0_1 = arith.constant 0 : index
    %1 = vector.load %arg5[%c1, %c0_1] : memref<3x128xf32, #tpu.memory_space<vmem>>, vector<1x128xf32>
    %c2 = arith.constant 2 : index
    %c0_2 = arith.constant 0 : index
    %2 = vector.load %arg5[%c2, %c0_2] : memref<3x128xf32, #tpu.memory_space<vmem>>, vector<1x128xf32>
    %c0_3 = arith.constant 0 : index
    %c0_4 = arith.constant 0 : index
    %c0_5 = arith.constant 0 : index
    %3 = vector.load %arg1[%c0_3, %c0_4, %c0_5] : memref<1x26x4xf32, #tpu.memory_space<vmem>>, vector<1x24x4xf32>
    %4 = vector.shape_cast %3 : vector<1x24x4xf32> to vector<24x4xf32>
    %c0_6 = arith.constant 0 : index
    %c0_7 = arith.constant 0 : index
    %c0_8 = arith.constant 0 : index
    %5 = vector.load %arg2[%c0_6, %c0_7, %c0_8] : memref<3x4x128xf32, #tpu.memory_space<vmem>>, vector<1x4x128xf32>
    %6 = vector.shape_cast %5 : vector<1x4x128xf32> to vector<4x128xf32>
    %cst = arith.constant dense<0.000000e+00> : vector<24x128xf32>
    %7 = tpu.matmul %4, %6, %cst {dimension_numbers = #tpu.dot_dimension_numbers<[1], [0], [0], [1], [0, 0, 1, 1], [], []>} : vector<24x4xf32>, vector<4x128xf32>, vector<24x128xf32> -> vector<24x128xf32>
    %c0_9 = arith.constant 0 : index
    %c1_10 = arith.constant 1 : index
    %c0_11 = arith.constant 0 : index
    %8 = vector.load %arg1[%c0_9, %c1_10, %c0_11] : memref<1x26x4xf32, #tpu.memory_space<vmem>>, vector<1x24x4xf32>
    %9 = vector.shape_cast %8 : vector<1x24x4xf32> to vector<24x4xf32>
    %c1_12 = arith.constant 1 : index
    %c0_13 = arith.constant 0 : index
    %c0_14 = arith.constant 0 : index
    %10 = vector.load %arg2[%c1_12, %c0_13, %c0_14] : memref<3x4x128xf32, #tpu.memory_space<vmem>>, vector<1x4x128xf32>
    %11 = vector.shape_cast %10 : vector<1x4x128xf32> to vector<4x128xf32>
    %cst_15 = arith.constant dense<0.000000e+00> : vector<24x128xf32>
    %12 = tpu.matmul %9, %11, %cst_15 {dimension_numbers = #tpu.dot_dimension_numbers<[1], [0], [0], [1], [0, 0, 1, 1], [], []>} : vector<24x4xf32>, vector<4x128xf32>, vector<24x128xf32> -> vector<24x128xf32>
    %13 = arith.addf %7, %12 : vector<24x128xf32>
    %c0_16 = arith.constant 0 : index
    %c2_17 = arith.constant 2 : index
    %c0_18 = arith.constant 0 : index
    %14 = vector.load %arg1[%c0_16, %c2_17, %c0_18] : memref<1x26x4xf32, #tpu.memory_space<vmem>>, vector<1x24x4xf32>
    %15 = vector.shape_cast %14 : vector<1x24x4xf32> to vector<24x4xf32>
    %c2_19 = arith.constant 2 : index
    %c0_20 = arith.constant 0 : index
    %c0_21 = arith.constant 0 : index
    %16 = vector.load %arg2[%c2_19, %c0_20, %c0_21] : memref<3x4x128xf32, #tpu.memory_space<vmem>>, vector<1x4x128xf32>
    %17 = vector.shape_cast %16 : vector<1x4x128xf32> to vector<4x128xf32>
    %cst_22 = arith.constant dense<0.000000e+00> : vector<24x128xf32>
    %18 = tpu.matmul %15, %17, %cst_22 {dimension_numbers = #tpu.dot_dimension_numbers<[1], [0], [0], [1], [0, 0, 1, 1], [], []>} : vector<24x4xf32>, vector<4x128xf32>, vector<24x128xf32> -> vector<24x128xf32>
    %19 = arith.addf %13, %18 : vector<24x128xf32>
    %20 = vector.broadcast %0 : vector<1x128xf32> to vector<24x128xf32>
    %21 = arith.addf %19, %20 : vector<24x128xf32>
    %cst_23 = arith.constant 0.00999999977 : f32
    %22 = vector.broadcast %cst_23 : f32 to vector<24x128xf32>
    %23 = arith.mulf %22, %21 : vector<24x128xf32>
    %24 = arith.maximumf %21, %23 : vector<24x128xf32>
    %25 = vector.shape_cast %24 : vector<24x128xf32> to vector<1x24x128xf32>
    %26 = tpu.iota {dimensions = array<i32: 1>} : vector<1x24x128xi32>
    %c1_i32 = arith.constant 1 : i32
    %27 = vector.broadcast %c1_i32 : i32 to vector<1x24x128xi32>
    %28 = arith.cmpi sge, %26, %27 : vector<1x24x128xi32>
    %c17_i32 = arith.constant 17 : i32
    %29 = vector.broadcast %c17_i32 : i32 to vector<1x24x128xi32>
    %30 = arith.cmpi slt, %26, %29 : vector<1x24x128xi32>
    %31 = arith.andi %28, %30 : vector<1x24x128xi1>
    %cst_24 = arith.constant 0.000000e+00 : f32
    %32 = vector.broadcast %cst_24 : f32 to vector<1x24x128xf32>
    %33 = arith.select %31, %25, %32 : vector<1x24x128xi1>, vector<1x24x128xf32>
    %34 = vector.extract_strided_slice %33 {offsets = [0, 0, 0], sizes = [1, 16, 128], strides = [1, 1, 1]} : vector<1x24x128xf32> to vector<1x16x128xf32>
    %35 = vector.shape_cast %34 : vector<1x16x128xf32> to vector<16x128xf32>
    %c0_25 = arith.constant 0 : index
    %c0_26 = arith.constant 0 : index
    %c0_27 = arith.constant 0 : index
    %36 = vector.load %arg3[%c0_25, %c0_26, %c0_27] : memref<3x128x128xf32, #tpu.memory_space<vmem>>, vector<1x128x128xf32>
    %37 = vector.shape_cast %36 : vector<1x128x128xf32> to vector<128x128xf32>
    %cst_28 = arith.constant dense<0.000000e+00> : vector<16x128xf32>
    %38 = tpu.matmul %35, %37, %cst_28 {dimension_numbers = #tpu.dot_dimension_numbers<[1], [0], [0], [1], [0, 0, 1, 1], [], []>} : vector<16x128xf32>, vector<128x128xf32>, vector<16x128xf32> -> vector<16x128xf32>
    %39 = vector.extract_strided_slice %33 {offsets = [0, 1, 0], sizes = [1, 16, 128], strides = [1, 1, 1]} : vector<1x24x128xf32> to vector<1x16x128xf32>
    %40 = vector.shape_cast %39 : vector<1x16x128xf32> to vector<16x128xf32>
    %c1_29 = arith.constant 1 : index
    %c0_30 = arith.constant 0 : index
    %c0_31 = arith.constant 0 : index
    %41 = vector.load %arg3[%c1_29, %c0_30, %c0_31] : memref<3x128x128xf32, #tpu.memory_space<vmem>>, vector<1x128x128xf32>
    %42 = vector.shape_cast %41 : vector<1x128x128xf32> to vector<128x128xf32>
    %cst_32 = arith.constant dense<0.000000e+00> : vector<16x128xf32>
    %43 = tpu.matmul %40, %42, %cst_32 {dimension_numbers = #tpu.dot_dimension_numbers<[1], [0], [0], [1], [0, 0, 1, 1], [], []>} : vector<16x128xf32>, vector<128x128xf32>, vector<16x128xf32> -> vector<16x128xf32>
    %44 = arith.addf %38, %43 : vector<16x128xf32>
    %45 = vector.extract_strided_slice %33 {offsets = [0, 2, 0], sizes = [1, 16, 128], strides = [1, 1, 1]} : vector<1x24x128xf32> to vector<1x16x128xf32>
    %46 = vector.shape_cast %45 : vector<1x16x128xf32> to vector<16x128xf32>
    %c2_33 = arith.constant 2 : index
    %c0_34 = arith.constant 0 : index
    %c0_35 = arith.constant 0 : index
    %47 = vector.load %arg3[%c2_33, %c0_34, %c0_35] : memref<3x128x128xf32, #tpu.memory_space<vmem>>, vector<1x128x128xf32>
    %48 = vector.shape_cast %47 : vector<1x128x128xf32> to vector<128x128xf32>
    %cst_36 = arith.constant dense<0.000000e+00> : vector<16x128xf32>
    %49 = tpu.matmul %46, %48, %cst_36 {dimension_numbers = #tpu.dot_dimension_numbers<[1], [0], [0], [1], [0, 0, 1, 1], [], []>} : vector<16x128xf32>, vector<128x128xf32>, vector<16x128xf32> -> vector<16x128xf32>
    %50 = arith.addf %44, %49 : vector<16x128xf32>
    %51 = vector.broadcast %1 : vector<1x128xf32> to vector<16x128xf32>
    %52 = arith.addf %50, %51 : vector<16x128xf32>
    %cst_37 = arith.constant 0.00999999977 : f32
    %53 = vector.broadcast %cst_37 : f32 to vector<16x128xf32>
    %54 = arith.mulf %53, %52 : vector<16x128xf32>
    %55 = arith.maximumf %52, %54 : vector<16x128xf32>
    %c0_38 = arith.constant 0 : index
    %c2_39 = arith.constant 2 : index
    %c0_40 = arith.constant 0 : index
    %56 = vector.load %arg1[%c0_38, %c2_39, %c0_40] : memref<1x26x4xf32, #tpu.memory_space<vmem>>, vector<1x16x4xf32>
    %57 = vector.shape_cast %56 : vector<1x16x4xf32> to vector<16x4xf32>
    %c0_41 = arith.constant 0 : index
    %c0_42 = arith.constant 0 : index
    %58 = vector.load %arg4[%c0_41, %c0_42] : memref<4x128xf32, #tpu.memory_space<vmem>>, vector<4x128xf32>
    %cst_43 = arith.constant dense<0.000000e+00> : vector<16x128xf32>
    %59 = tpu.matmul %57, %58, %cst_43 {dimension_numbers = #tpu.dot_dimension_numbers<[1], [0], [0], [1], [0, 0, 1, 1], [], []>} : vector<16x4xf32>, vector<4x128xf32>, vector<16x128xf32> -> vector<16x128xf32>
    %60 = vector.broadcast %2 : vector<1x128xf32> to vector<16x128xf32>
    %61 = arith.addf %59, %60 : vector<16x128xf32>
    %62 = arith.addf %55, %61 : vector<16x128xf32>
    %63 = vector.shape_cast %62 : vector<16x128xf32> to vector<1x16x128xf32>
    %c0_44 = arith.constant 0 : index
    %c0_45 = arith.constant 0 : index
    %c0_46 = arith.constant 0 : index
    %64 = vector.load %arg6[%c0_44, %c0_45, %c0_46] : memref<1x16x128xf32, #tpu.memory_space<vmem>>, vector<1x16x128xf32>
    tpu.vector_store %arg6[%c0_44, %c0_45, %c0_46], %63 {strides = array<i32>} : memref<1x16x128xf32, #tpu.memory_space<vmem>>, vector<1x16x128xf32>,
    return
  }
  func.func @transform_0(%arg0: i32) -> (i32, i32, i32) {
    %c0_i32 = arith.constant 0 : i32
    %c0_i32_0 = arith.constant 0 : i32
    %c0_i32_1 = arith.constant 0 : i32
    return %arg0, %c0_i32, %c0_i32_0 : i32, i32, i32
  }
  func.func @transform_1(%arg0: i32) -> (i32, i32, i32) {
    %c0_i32 = arith.constant 0 : i32
    %c0_i32_0 = arith.constant 0 : i32
    %c0_i32_1 = arith.constant 0 : i32
    %c0_i32_2 = arith.constant 0 : i32
    return %c0_i32, %c0_i32_0, %c0_i32_1 : i32, i32, i32
  }
  func.func @transform_2(%arg0: i32) -> (i32, i32, i32) {
    %c0_i32 = arith.constant 0 : i32
    %c0_i32_0 = arith.constant 0 : i32
    %c0_i32_1 = arith.constant 0 : i32
    %c0_i32_2 = arith.constant 0 : i32
    return %c0_i32, %c0_i32_0, %c0_i32_1 : i32, i32, i32
  }
  func.func @transform_3(%arg0: i32) -> (i32, i32) {
    %c0_i32 = arith.constant 0 : i32
    %c0_i32_0 = arith.constant 0 : i32
    %c0_i32_1 = arith.constant 0 : i32
    return %c0_i32, %c0_i32_0 : i32, i32
  }
  func.func @transform_4(%arg0: i32) -> (i32, i32) {
    %c0_i32 = arith.constant 0 : i32
    %c0_i32_0 = arith.constant 0 : i32
    %c0_i32_1 = arith.constant 0 : i32
    return %c0_i32, %c0_i32_0 : i32, i32
  }
  func.func @transform_5(%arg0: i32) -> (i32, i32, i32) {
    %c0_i32 = arith.constant 0 : i32
    %c0_i32_0 = arith.constant 0 : i32
    %c0_i32_1 = arith.constant 0 : i32
    return %arg0, %c0_i32, %c0_i32_0 : i32, i32, i32
  }
}

</mosaic_0001>

<llo_original>
// kernel: tpu_custom_call.1
$region0: #{tpu_custom_call.1}
  #allocation0 [shape = 'u32[]', space=smem, size = 0x4, offset = 0x4, fixed_abs, tag = 'smem constant byte address 0x4 - core index']
  #allocation1 [shape = 'u32[72,128]{1,0:T(1,128)}', space=vmem, size = 0x9000, scoped, tag = 'internal scratch']
  %s0 = inlined_call_operand.vmem [shape: f32[2,26,4], index: 0, kind: input, shape index: {}]
  %s1 = inlined_call_operand.vmem [shape: f32[3,4,128], index: 1, kind: input, shape index: {}]
  %s2 = inlined_call_operand.hbm [shape: f32[3,128,128], index: 2, kind: input, shape index: {}]
  %s3 = inlined_call_operand.vmem [shape: f32[4,128], index: 3, kind: input, shape index: {}]
  %s4 = inlined_call_operand.vmem [shape: f32[3,128], index: 4, kind: input, shape index: {}]
  %s5 = inlined_call_operand.hbm [shape: f32[2,16,128], index: 5, kind: output, shape index: {}]
  %s6 = sld [smem:[#allocation0]]
  $region57: #{tpu_custom_call.1} parent=0
    _
  %s8 = ssub.s32 1, %s6
  %s9 = scalar_select 0, %s8, %s6
  $region1: #{tpu_custom_call.1} parent=0
    #allocation2 [shape = 'u8[196608]{0}', space=vmem, size = 0x30000, scoped, tag = 'input window, operand 2, single buffered']
    #allocation3 [shape = 's32[2]{0}', space=sflag, size = 0x8, scoped, tag = 'scoped memory for tpu_custom_call.1']
    #allocation4 [shape = 's32[2]{0}', space=sflag, size = 0x8, scoped, tag = 'scoped memory for tpu_custom_call.1']
    #allocation5 [shape = 'u8[16384]{0}', space=vmem, size = 0x4000, scoped, tag = 'output window, operand 0']
    %10 = vsyncpa [#allocation3], 0
    %11 = vsyncpa [#allocation4], 0
    %s12 = scalar_lea.sflag [#allocation4], 1
    %13 = vsyncpa %s12, 0
    loop: start=0, step=1, limit=4
    $region2: #{tpu_custom_call.1} parent=1 // loop_pre_header
      _
    $region3: #{tpu_custom_call.1} parent=1 // loop_header
      %s15 = sphi 0, %s19
      %p16 = scmp.ge.s32.totalorder %s15, 4
      %s25 = sphi 0, %s27
      %s28 = sphi 0, %s25
      %s29 = sphi 0, %s28
      %s45 = sphi 0, %s29
      %s49 = sphi 0, %s49
      %s51 = sphi 0, %s49
      %s52 = sphi 0, %s51
      %s66 = sphi 0, %s52
      %s70 = sphi 0, %s70
      %s72 = sphi 0, %s70
      %s73 = sphi 0, %s72
      %s87 = sphi 0, %s73
      %s91 = sphi 0, %s91
      %s93 = sphi 0, %s91
      %s94 = sphi 0, %s93
      %s108 = sphi 0, %s94
      %s112 = sphi 0, %s112
      %s114 = sphi 0, %s112
      %s115 = sphi 0, %s114
      %s129 = sphi 0, %s115
      %s135 = sphi 0, %s137
      %s138 = sphi 0, %s135
      %s139 = sphi 0, %s138
      %s155 = sphi 0, %s139
    $region4: #{tpu_custom_call.1} parent=1 // loop_header_branch
      %18 = sbr.rel (%p16) target = $region8
    $region5: #{tpu_custom_call.1} parent=1 // loop_body
      %s20 = ssub.s32 %s15, 1
      %s21 = ssub.s32 %s15, 2
      %s22 = sadd.s32 %s15, 1
      %s23 = ssub.s32 %s15, %s22
      %p24 = scmp.eq.s32.totalorder %s23, 0
      %s26 = sadd.s32 %s25, 1
      %s27 = scalar_select %p24, %s25, %s26
      %p30 = pneg %p24
      %p31 = scmp.eq.s32.totalorder %s15, 1
      %p32 = por %p30, %p31
      %p33 = scmp.ne.s32.totalorder %s25, %s28
      %p34 = scmp.eq.s32.totalorder %s15, 0
      %p35 = por %p33, %p34
      %p36 = scmp.ne.s32.totalorder %s25, %s28
      %p37 = scmp.eq.s32.totalorder %s20, 1
      %p38 = por %p36, %p37
      %p39 = scmp.ne.s32.totalorder %s28, %s29
      %p40 = scmp.eq.s32.totalorder %s20, 0
      %p41 = por %p39, %p40
      %p42 = scmp.ne.s32.totalorder %s28, %s29
      %p43 = scmp.eq.s32.totalorder %s21, 1
      %p44 = por %p42, %p43
      %p46 = scmp.ne.s32.totalorder %s29, %s45
      %p47 = scmp.eq.s32.totalorder %s21, 0
      %p48 = por %p46, %p47
      %s50 = sadd.s32 %s49, 1
      %p53 = scmp.eq.s32.totalorder %s15, 1
      %p54 = scmp.ne.s32.totalorder %s49, %s51
      %p55 = scmp.eq.s32.totalorder %s15, 0
      %p56 = por %p54, %p55
      %p57 = scmp.ne.s32.totalorder %s49, %s51
      %p58 = scmp.eq.s32.totalorder %s20, 1
      %p59 = por %p57, %p58
      %p60 = scmp.ne.s32.totalorder %s51, %s52
      %p61 = scmp.eq.s32.totalorder %s20, 0
      %p62 = por %p60, %p61
      %p63 = scmp.ne.s32.totalorder %s51, %s52
      %p64 = scmp.eq.s32.totalorder %s21, 1
      %p65 = por %p63, %p64
      %p67 = scmp.ne.s32.totalorder %s52, %s66
      %p68 = scmp.eq.s32.totalorder %s21, 0
      %p69 = por %p67, %p68
      %s71 = sadd.s32 %s70, 1
      %p74 = scmp.eq.s32.totalorder %s15, 1
      %p75 = scmp.ne.s32.totalorder %s70, %s72
      %p76 = scmp.eq.s32.totalorder %s15, 0
      %p77 = por %p75, %p76
      %p78 = scmp.ne.s32.totalorder %s70, %s72
      %p79 = scmp.eq.s32.totalorder %s20, 1
      %p80 = por %p78, %p79
      %p81 = scmp.ne.s32.totalorder %s72, %s73
      %p82 = scmp.eq.s32.totalorder %s20, 0
      %p83 = por %p81, %p82
      %p84 = scmp.ne.s32.totalorder %s72, %s73
      %p85 = scmp.eq.s32.totalorder %s21, 1
      %p86 = por %p84, %p85
      %p88 = scmp.ne.s32.totalorder %s73, %s87
      %p89 = scmp.eq.s32.totalorder %s21, 0
      %p90 = por %p88, %p89
      %s92 = sadd.s32 %s91, 1
      %p95 = scmp.eq.s32.totalorder %s15, 1
      %p96 = scmp.ne.s32.totalorder %s91, %s93
      %p97 = scmp.eq.s32.totalorder %s15, 0
      %p98 = por %p96, %p97
      %p99 = scmp.ne.s32.totalorder %s91, %s93
      %p100 = scmp.eq.s32.totalorder %s20, 1
      %p101 = por %p99, %p100
      %p102 = scmp.ne.s32.totalorder %s93, %s94
      %p103 = scmp.eq.s32.totalorder %s20, 0
      %p104 = por %p102, %p103
      %p105 = scmp.ne.s32.totalorder %s93, %s94
      %p106 = scmp.eq.s32.totalorder %s21, 1
      %p107 = por %p105, %p106
      %p109 = scmp.ne.s32.totalorder %s94, %s108
      %p110 = scmp.eq.s32.totalorder %s21, 0
      %p111 = por %p109, %p110
      %s113 = sadd.s32 %s112, 1
      %p116 = scmp.eq.s32.totalorder %s15, 1
      %p117 = scmp.ne.s32.totalorder %s112, %s114
      %p118 = scmp.eq.s32.totalorder %s15, 0
      %p119 = por %p117, %p118
      %p120 = scmp.ne.s32.totalorder %s112, %s114
      %p121 = scmp.eq.s32.totalorder %s20, 1
      %p122 = por %p120, %p121
      %p123 = scmp.ne.s32.totalorder %s114, %s115
      %p124 = scmp.eq.s32.totalorder %s20, 0
      %p125 = por %p123, %p124
      %p126 = scmp.ne.s32.totalorder %s114, %s115
      %p127 = scmp.eq.s32.totalorder %s21, 1
      %p128 = por %p126, %p127
      %p130 = scmp.ne.s32.totalorder %s115, %s129
      %p131 = scmp.eq.s32.totalorder %s21, 0
      %p132 = por %p130, %p131
      %s133 = ssub.s32 %s15, %s22
      %p134 = scmp.eq.s32.totalorder %s133, 0
      %s136 = sadd.s32 %s135, 1
      %s137 = scalar_select %p134, %s135, %s136
      %p140 = pneg %p134
      %p141 = scmp.eq.s32.totalorder %s15, 1
      %p142 = por %p140, %p141
      %p143 = scmp.ne.s32.totalorder %s135, %s138
      %p144 = scmp.eq.s32.totalorder %s15, 0
      %p145 = por %p143, %p144
      %p146 = scmp.ne.s32.totalorder %s135, %s138
      %p147 = scmp.eq.s32.totalorder %s20, 1
      %p148 = por %p146, %p147
      %p149 = scmp.ne.s32.totalorder %s138, %s139
      %p150 = scmp.eq.s32.totalorder %s20, 0
      %p151 = por %p149, %p150
      %p152 = scmp.ne.s32.totalorder %s138, %s139
      %p153 = scmp.eq.s32.totalorder %s21, 1
      %p154 = por %p152, %p153
      %p156 = scmp.ne.s32.totalorder %s139, %s155
      %p157 = scmp.eq.s32.totalorder %s21, 0
      %p158 = por %p156, %p157
      %p159 = scmp.le.s32.totalorder 1, %s15
      %p160 = scmp.lt.s32.totalorder %s15, 3
      %p161 = pnand %p159, %p160
      %p162 = pneg %p161
      // Predicated region
      $region9: #{tpu_custom_call.1} parent=5 // pred_check
        _
      $region10: #{tpu_custom_call.1} parent=5 // pred_check_branch
        %164 = sbr.rel (%p161) target = $region12
      $region11: #{tpu_custom_call.1} parent=5 // pred_region
        %s165 = ssub.s32 %s15, 1
        // Predicated region
        $region13: #{tpu_custom_call.1} parent=11 // pred_check
          %p166 = pneg %p62
        $region14: #{tpu_custom_call.1} parent=11 // pred_check_branch
          %168 = sbr.rel (%p166) target = $region16
        $region15: #{tpu_custom_call.1} parent=11 // pred_region
          _
        $region16: #{tpu_custom_call.1} parent=11 // pred_fallthru
          _
        // Predicated region
        $region17: #{tpu_custom_call.1} parent=11 // pred_check
          %p169 = pneg %p83
        $region18: #{tpu_custom_call.1} parent=11 // pred_check_branch
          %171 = sbr.rel (%p169) target = $region20
        $region19: #{tpu_custom_call.1} parent=11 // pred_region
          %173 = vsyncadd [#allocation3], 0
          %s174 = sshll.u32 %s2, 4
          %s175 = int_to_ptr.hbm [resolvable:$true] %s174
          %s176 = sshll.u32 [#allocation2], 4
          %s177 = int_to_ptr.vmem [resolvable:$true] %s176
          %182 = dma.hbm_to_vmem [thread:$0]  %s175, 6144, %s177, [#allocation3], 128, 128, 8
        $region20: #{tpu_custom_call.1} parent=11 // pred_fallthru
          _
        // Predicated region
        $region21: #{tpu_custom_call.1} parent=11 // pred_check
          %p183 = pneg %p104
        $region22: #{tpu_custom_call.1} parent=11 // pred_check_branch
          %185 = sbr.rel (%p183) target = $region24
        $region23: #{tpu_custom_call.1} parent=11 // pred_region
          _
        $region24: #{tpu_custom_call.1} parent=11 // pred_fallthru
          _
        // Predicated region
        $region25: #{tpu_custom_call.1} parent=11 // pred_check
          %p186 = pneg %p125
        $region26: #{tpu_custom_call.1} parent=11 // pred_check_branch
          %188 = sbr.rel (%p186) target = $region28
        $region27: #{tpu_custom_call.1} parent=11 // pred_region
          _
        $region28: #{tpu_custom_call.1} parent=11 // pred_fallthru
          _
      $region12: #{tpu_custom_call.1} parent=5 // pred_fallthru
        _
      %p189 = scmp.lt.s32.totalorder %s15, 2
      // Predicated region
      $region29: #{tpu_custom_call.1} parent=5 // pred_check
        %p190 = pneg %p189
      $region30: #{tpu_custom_call.1} parent=5 // pred_check_branch
        %192 = sbr.rel (%p190) target = $region32
      $region31: #{tpu_custom_call.1} parent=5 // pred_region
        // Predicated region
        $region33: #{tpu_custom_call.1} parent=31 // pred_check
          %p193 = pneg %p35
        $region34: #{tpu_custom_call.1} parent=31 // pred_check_branch
          %195 = sbr.rel (%p193) target = $region36
        $region35: #{tpu_custom_call.1} parent=31 // pred_region
          %p196 = scmp.lt.s32.totalorder %s15, 1
          %s197 = scalar_select %p196, %s15, 1
          %s198 = smul.addr %s197, 4
          %s199 = smul.addr %s198, 8
          %s200 = scalar_lea.vmem %s0, %s199
        $region36: #{tpu_custom_call.1} parent=31 // pred_fallthru
          _
      $region32: #{tpu_custom_call.1} parent=5 // pred_fallthru
        _
      %p201 = scmp.le.s32.totalorder 1, %s15
      %p202 = scmp.lt.s32.totalorder %s15, 3
      %p203 = pnand %p201, %p202
      %p204 = pneg %p203
      // Predicated region
      $region37: #{tpu_custom_call.1} parent=5 // pred_check
        _
      $region38: #{tpu_custom_call.1} parent=5 // pred_check_branch
        %206 = sbr.rel (%p203) target = $region40
      $region39: #{tpu_custom_call.1} parent=5 // pred_region
        %s207 = ssub.s32 %s15, 1
        // Predicated region
        $region41: #{tpu_custom_call.1} parent=39 // pred_check
          %p208 = pneg %p83
        $region42: #{tpu_custom_call.1} parent=39 // pred_check_branch
          %210 = sbr.rel (%p208) target = $region44
        $region43: #{tpu_custom_call.1} parent=39 // pred_region
          %212 = dma.done [#allocation3], 6144
        $region44: #{tpu_custom_call.1} parent=39 // pred_fallthru
          _
        %p213 = scmp.lt.s32.totalorder %s20, 1
        %s214 = scalar_select %p213, %s20, 1
        %s215 = smul.addr %s214, 4
        %s216 = smul.addr %s215, 8
        %s217 = scalar_lea.vmem %s0, %s216
        %p218 = pneg %p41
        %p219 = pneg %p38
        %p220 = pneg %p62
        %p221 = pneg %p59
        %p222 = pneg %p83
        %p223 = pneg %p80
        %p224 = pneg %p104
        %p225 = pneg %p101
        %p226 = pneg %p125
        %p227 = pneg %p122
        %p228 = pneg %p151
        %p229 = pneg %p148
        %s230 = sand.u32 %s138, 1
        %s231 = scalar_lea.sflag [#allocation4], %s230
        %s232 = sand.u32 %s138, 1
        %s233 = smul.addr %s232, 16
        %s234 = scalar_lea.vmem [#allocation5], %s233
        %p235 = scmp.lt.s32.totalorder %s20, 1
        %s236 = scalar_select %p235, %s20, 1
        %s237 = smul.addr %s236, 4
        %s238 = smul.addr %s237, 8
        %s239 = scalar_lea.vmem %s0, %s238
        %v240 = vld [vmem:[%s4] sm:$0x1]
        %v241 = vld [vmem:[%s4 + $0x1] sm:$0x1]
        %v242 = vld [vmem:[%s4 + $0x2] sm:$0x1]
        %v243 = vld [vmem:[%s239] sm:$0xff]
        %v244 = vld [vmem:[%s239 + $0x8] sm:$0xff]
        %v245 = vld [vmem:[%s239 + $0x10] sm:$0xff]
        %v246 = vld [vmem:[%s1] sm:$0xf]
        %v247 = vld [vmem:[%s239 + $0x1] sm:$0xff]
        %v248 = vld [vmem:[%s239 + $0x9] sm:$0xff]
        %v249 = vld [vmem:[%s239 + $0x11] sm:$0xff]
        %s250 = scalar_lea.vmem %s1, 4
        %v251 = vld [vmem:[%s250] sm:$0xf]
        %vm252 = vcmask 31744
        %v254 = vsel %vm252, %v247, 0
        %v257 = vsel %vm252, %v248, 0
        %v260 = vsel %vm252, %v249, 0
        %vm262 = vcmask 1043456
        %v264 = vsel %vm262, %v251, 0
        %266 = vmatpush.msra.mxu0 0.0
        %267 = vmatpush.msra.mxu0 0.0
        %268 = vmatpush.msra.mxu0 0.0
        %269 = vmatpush.msra.mxu0 0.0
        %270 = vmatpush.msra.mxu0 0.0
        %271 = vmatpush.msra.mxu0 0.0
        %272 = vmatpush.msra.mxu0 0.0
        %273 = vmatpush.msra.mxu0 0.0
        %274 = vmatpush.msra.mxu0 0.0
        %275 = vmatpush.msra.mxu0 0.0
        %276 = vmatpush.msra.mxu0 0.0
        %277 = vmatpush.msra.mxu0 0.0
        %278 = vmatpush.msra.mxu0 0.0
        %279 = vmatpush.msra.mxu0 0.0
        %280 = vmatpush.msra.mxu0 0.0
        %281 = vmatpush.msra.mxu0 %v264
        %282 = vmatmul.f32.gmra.mxu0 %v254
        %v283 = vpop.f32.mrf.mxu0
        %v284 = vadd.f32 0.0, %v283
        %285 = vmatmul.f32.gmra.mxu0 %v257
        %v286 = vpop.f32.mrf.mxu0
        %v287 = vadd.f32 0.0, %v286
        %288 = vmatmul.f32.gmra.mxu0 %v260
        %v289 = vpop.f32.mrf.mxu0
        %v290 = vadd.f32 0.0, %v289
        %291 = vdwg.mxu0
        %v293 = vsel %vm252, %v243, 0
        %v296 = vsel %vm252, %v244, 0
        %v299 = vsel %vm252, %v245, 0
        %v302 = vsel %vm262, %v246, 0
        %304 = vmatpush.msra.mxu0 0.0
        %305 = vmatpush.msra.mxu0 0.0
        %306 = vmatpush.msra.mxu0 0.0
        %307 = vmatpush.msra.mxu0 0.0
        %308 = vmatpush.msra.mxu0 0.0
        %309 = vmatpush.msra.mxu0 0.0
        %310 = vmatpush.msra.mxu0 0.0
        %311 = vmatpush.msra.mxu0 0.0
        %312 = vmatpush.msra.mxu0 0.0
        %313 = vmatpush.msra.mxu0 0.0
        %314 = vmatpush.msra.mxu0 0.0
        %315 = vmatpush.msra.mxu0 0.0
        %316 = vmatpush.msra.mxu0 0.0
        %317 = vmatpush.msra.mxu0 0.0
        %318 = vmatpush.msra.mxu0 0.0
        %319 = vmatpush.msra.mxu0 %v302
        %320 = vmatmul.f32.gmra.mxu0 %v293
        %v321 = vpop.f32.mrf.mxu0
        %v322 = vadd.f32 %v284, %v321
        %323 = vmatmul.f32.gmra.mxu0 %v296
        %v324 = vpop.f32.mrf.mxu0
        %v325 = vadd.f32 %v287, %v324
        %326 = vmatmul.f32.gmra.mxu0 %v299
        %v327 = vpop.f32.mrf.mxu0
        %v328 = vadd.f32 %v290, %v327
        %329 = vdwg.mxu0
        %v330 = vld [vmem:[%s239 + $0x2] sm:$0xff]
        %v331 = vld [vmem:[%s239 + $0xa] sm:$0xff]
        %v332 = vld [vmem:[%s239 + $0x12] sm:$0xff]
        %s333 = scalar_lea.vmem %s1, 8
        %v334 = vld [vmem:[%s333] sm:$0xf]
        %v336 = vsel %vm252, %v330, 0
        %v339 = vsel %vm252, %v331, 0
        %v342 = vsel %vm252, %v332, 0
        %v345 = vsel %vm262, %v334, 0
        %347 = vmatpush.msra.mxu0 0.0
        %348 = vmatpush.msra.mxu0 0.0
        %349 = vmatpush.msra.mxu0 0.0
        %350 = vmatpush.msra.mxu0 0.0
        %351 = vmatpush.msra.mxu0 0.0
        %352 = vmatpush.msra.mxu0 0.0
        %353 = vmatpush.msra.mxu0 0.0
        %354 = vmatpush.msra.mxu0 0.0
        %355 = vmatpush.msra.mxu0 0.0
        %356 = vmatpush.msra.mxu0 0.0
        %357 = vmatpush.msra.mxu0 0.0
        %358 = vmatpush.msra.mxu0 0.0
        %359 = vmatpush.msra.mxu0 0.0
        %360 = vmatpush.msra.mxu0 0.0
        %361 = vmatpush.msra.mxu0 0.0
        %362 = vmatpush.msra.mxu0 %v345
        %363 = vmatmul.f32.gmra.mxu0 %v336
        %v364 = vpop.f32.mrf.mxu0
        %v365 = vadd.f32 0.0, %v364
        %366 = vmatmul.f32.gmra.mxu0 %v339
        %v367 = vpop.f32.mrf.mxu0
        %v368 = vadd.f32 0.0, %v367
        %369 = vmatmul.f32.gmra.mxu0 %v342
        %v370 = vpop.f32.mrf.mxu0
        %v371 = vadd.f32 0.0, %v370
        %372 = vdwg.mxu0
        %v373 = vadd.f32 %v322, %v365
        %v374 = vadd.f32 %v325, %v368
        %v375 = vadd.f32 %v328, %v371
        %v376 = vperm.slane %v240, 0
        %v377 = vadd.f32 %v373, %v376
        %v378 = vadd.f32 %v374, %v376
        %v379 = vadd.f32 %v375, %v376
        %v380 = vmul.f32 %v377, 0.01
        %v381 = vmul.f32 %v378, 0.01
        %v382 = vmul.f32 %v379, 0.01
        %v383 = vmax.f32 %v377, %v380
        %v384 = vmax.f32 %v378, %v381
        %v385 = vmax.f32 %v379, %v382
        %v386 = vlaneseq
        %v387 = vshrl.u32 %v386, 7
        %v388 = vadd.s32 %v387, 8
        %v389 = vadd.s32 %v387, 16
        %vm390 = vcmp.ge.s32.totalorder %v387, 1
        %vm391 = vcmp.ge.s32.totalorder %v388, 1
        %vm392 = vcmp.ge.s32.totalorder %v389, 1
        %vm393 = vcmp.lt.s32.totalorder %v387, 17
        %vm394 = vcmp.lt.s32.totalorder %v388, 17
        %vm395 = vcmp.lt.s32.totalorder %v389, 17
        %vm396 = vmand %vm390, %vm393
        %vm397 = vmand %vm391, %vm394
        %vm398 = vmand %vm392, %vm395
        %v399 = vsel %vm396, %v383, 0.0
        %v400 = vsel %vm397, %v384, 0.0
        %v401 = vsel %vm398, %v385, 0.0
        %v402 = vld [vmem:[#allocation2] sm:$0xff]
        %v403 = vld [vmem:[#allocation2 + $0x8] sm:$0xff]
        %v404 = vld [vmem:[#allocation2 + $0x10] sm:$0xff]
        %v405 = vld [vmem:[#allocation2 + $0x18] sm:$0xff]
        %v406 = vld [vmem:[#allocation2 + $0x20] sm:$0xff]
        %v407 = vld [vmem:[#allocation2 + $0x28] sm:$0xff]
        %v408 = vld [vmem:[#allocation2 + $0x30] sm:$0xff]
        %v409 = vld [vmem:[#allocation2 + $0x38] sm:$0xff]
        %v410 = vld [vmem:[#allocation2 + $0x40] sm:$0xff]
        %v411 = vld [vmem:[#allocation2 + $0x48] sm:$0xff]
        %v412 = vld [vmem:[#allocation2 + $0x50] sm:$0xff]
        %v413 = vld [vmem:[#allocation2 + $0x58] sm:$0xff]
        %v414 = vld [vmem:[#allocation2 + $0x60] sm:$0xff]
        %v415 = vld [vmem:[#allocation2 + $0x68] sm:$0xff]
        %v416 = vld [vmem:[#allocation2 + $0x70] sm:$0xff]
        %v417 = vld [vmem:[#allocation2 + $0x78] sm:$0xff]
        %s418 = scalar_lea.vmem [#allocation2], 128
        %v419 = vld [vmem:[%s418] sm:$0xff]
        %v420 = vld [vmem:[%s418 + $0x8] sm:$0xff]
        %v421 = vld [vmem:[%s418 + $0x10] sm:$0xff]
        %v422 = vld [vmem:[%s418 + $0x18] sm:$0xff]
        %v423 = vld [vmem:[%s418 + $0x20] sm:$0xff]
        %v424 = vld [vmem:[%s418 + $0x28] sm:$0xff]
        %v425 = vld [vmem:[%s418 + $0x30] sm:$0xff]
        %v426 = vld [vmem:[%s418 + $0x38] sm:$0xff]
        %v427 = vld [vmem:[%s418 + $0x40] sm:$0xff]
        %v428 = vld [vmem:[%s418 + $0x48] sm:$0xff]
        %v429 = vld [vmem:[%s418 + $0x50] sm:$0xff]
        %v430 = vld [vmem:[%s418 + $0x58] sm:$0xff]
        %v431 = vld [vmem:[%s418 + $0x60] sm:$0xff]
        %v432 = vld [vmem:[%s418 + $0x68] sm:$0xff]
        %v433 = vld [vmem:[%s418 + $0x70] sm:$0xff]
        %v434 = vld [vmem:[%s418 + $0x78] sm:$0xff]
        %vm438 = vcmask 1046528
        %v439 = vrot.slane %v399, 1
        %v440 = vrot.slane %v400, 1
        %v441 = vsel %vm438, %v439, %v440
        %v442 = vrot.slane %v401, 1
        %v443 = vsel %vm438, %v440, %v442
        %446 = vmatpush.msra.mxu0 %v434
        %447 = vmatpush.msra.mxu0 %v433
        %448 = vmatpush.msra.mxu0 %v432
        %449 = vmatpush.msra.mxu0 %v431
        %450 = vmatpush.msra.mxu0 %v430
        %451 = vmatpush.msra.mxu0 %v429
        %452 = vmatpush.msra.mxu0 %v428
        %453 = vmatpush.msra.mxu0 %v427
        %454 = vmatpush.msra.mxu0 %v426
        %455 = vmatpush.msra.mxu0 %v425
        %456 = vmatpush.msra.mxu0 %v424
        %457 = vmatpush.msra.mxu0 %v423
        %458 = vmatpush.msra.mxu0 %v422
        %459 = vmatpush.msra.mxu0 %v421
        %460 = vmatpush.msra.mxu0 %v420
        %461 = vmatpush.msra.mxu0 %v419
        %462 = vmatmul.f32.gmra.mxu0 %v441
        %v463 = vpop.f32.mrf.mxu0
        %v464 = vadd.f32 0.0, %v463
        %465 = vmatmul.f32.gmra.mxu0 %v443
        %v466 = vpop.f32.mrf.mxu0
        %v467 = vadd.f32 0.0, %v466
        %468 = vdwg.mxu0
        %469 = vmatpush.msra.mxu0 %v417
        %470 = vmatpush.msra.mxu0 %v416
        %471 = vmatpush.msra.mxu0 %v415
        %472 = vmatpush.msra.mxu0 %v414
        %473 = vmatpush.msra.mxu0 %v413
        %474 = vmatpush.msra.mxu0 %v412
        %475 = vmatpush.msra.mxu0 %v411
        %476 = vmatpush.msra.mxu0 %v410
        %477 = vmatpush.msra.mxu0 %v409
        %478 = vmatpush.msra.mxu0 %v408
        %479 = vmatpush.msra.mxu0 %v407
        %480 = vmatpush.msra.mxu0 %v406
        %481 = vmatpush.msra.mxu0 %v405
        %482 = vmatpush.msra.mxu0 %v404
        %483 = vmatpush.msra.mxu0 %v403
        %484 = vmatpush.msra.mxu0 %v402
        %485 = vmatmul.f32.gmra.mxu0 %v399
        %v486 = vpop.f32.mrf.mxu0
        %v487 = vadd.f32 %v464, %v486
        %488 = vmatmul.f32.gmra.mxu0 %v400
        %v489 = vpop.f32.mrf.mxu0
        %v490 = vadd.f32 %v467, %v489
        %491 = vdwg.mxu0
        %s492 = scalar_lea.vmem [#allocation2], 256
        %v493 = vld [vmem:[%s492] sm:$0xff]
        %v494 = vld [vmem:[%s492 + $0x8] sm:$0xff]
        %v495 = vld [vmem:[%s492 + $0x10] sm:$0xff]
        %v496 = vld [vmem:[%s492 + $0x18] sm:$0xff]
        %v497 = vld [vmem:[%s492 + $0x20] sm:$0xff]
        %v498 = vld [vmem:[%s492 + $0x28] sm:$0xff]
        %v499 = vld [vmem:[%s492 + $0x30] sm:$0xff]
        %v500 = vld [vmem:[%s492 + $0x38] sm:$0xff]
        %v501 = vld [vmem:[%s492 + $0x40] sm:$0xff]
        %v502 = vld [vmem:[%s492 + $0x48] sm:$0xff]
        %v503 = vld [vmem:[%s492 + $0x50] sm:$0xff]
        %v504 = vld [vmem:[%s492 + $0x58] sm:$0xff]
        %v505 = vld [vmem:[%s492 + $0x60] sm:$0xff]
        %v506 = vld [vmem:[%s492 + $0x68] sm:$0xff]
        %v507 = vld [vmem:[%s492 + $0x70] sm:$0xff]
        %v508 = vld [vmem:[%s492 + $0x78] sm:$0xff]
        %vm509 = vcmask 1045504
        %v510 = vrot.slane %v399, 2
        %v511 = vrot.slane %v400, 2
        %v512 = vsel %vm509, %v510, %v511
        %v513 = vrot.slane %v401, 2
        %v514 = vsel %vm509, %v511, %v513
        %517 = vmatpush.msra.mxu0 %v508
        %518 = vmatpush.msra.mxu0 %v507
        %519 = vmatpush.msra.mxu0 %v506
        %520 = vmatpush.msra.mxu0 %v505
        %521 = vmatpush.msra.mxu0 %v504
        %522 = vmatpush.msra.mxu0 %v503
        %523 = vmatpush.msra.mxu0 %v502
        %524 = vmatpush.msra.mxu0 %v501
        %525 = vmatpush.msra.mxu0 %v500
        %526 = vmatpush.msra.mxu0 %v499
        %527 = vmatpush.msra.mxu0 %v498
        %528 = vmatpush.msra.mxu0 %v497
        %529 = vmatpush.msra.mxu0 %v496
        %530 = vmatpush.msra.mxu0 %v495
        %531 = vmatpush.msra.mxu0 %v494
        %532 = vmatpush.msra.mxu0 %v493
        %533 = vmatmul.f32.gmra.mxu0 %v512
        %v534 = vpop.f32.mrf.mxu0
        %v535 = vadd.f32 0.0, %v534
        %536 = vmatmul.f32.gmra.mxu0 %v514
        %v537 = vpop.f32.mrf.mxu0
        %v538 = vadd.f32 0.0, %v537
        %539 = vdwg.mxu0
        %v540 = vadd.f32 %v487, %v535
        %v541 = vadd.f32 %v490, %v538
        %v542 = vperm.slane %v241, 0
        %v543 = vadd.f32 %v540, %v542
        %v544 = vadd.f32 %v541, %v542
        %v545 = vmul.f32 %v543, 0.01
        %v546 = vmul.f32 %v544, 0.01
        %v547 = vmax.f32 %v543, %v545
        %v548 = vmax.f32 %v544, %v546
        %v549 = vld [vmem:[%s239 + $0x2] sm:$0xff]
        %v550 = vld [vmem:[%s239 + $0xa] sm:$0xff]
        %v551 = vld [vmem:[%s3] sm:$0xf]
        %v552 = vperm.slane %v242, 0
        %v554 = vsel %vm252, %v549, 0
        %v557 = vsel %vm252, %v550, 0
        %v560 = vsel %vm262, %v551, 0
        %562 = vmatpush.msra.mxu0 0.0
        %563 = vmatpush.msra.mxu0 0.0
        %564 = vmatpush.msra.mxu0 0.0
        %565 = vmatpush.msra.mxu0 0.0
        %566 = vmatpush.msra.mxu0 0.0
        %567 = vmatpush.msra.mxu0 0.0
        %568 = vmatpush.msra.mxu0 0.0
        %569 = vmatpush.msra.mxu0 0.0
        %570 = vmatpush.msra.mxu0 0.0
        %571 = vmatpush.msra.mxu0 0.0
        %572 = vmatpush.msra.mxu0 0.0
        %573 = vmatpush.msra.mxu0 0.0
        %574 = vmatpush.msra.mxu0 0.0
        %575 = vmatpush.msra.mxu0 0.0
        %576 = vmatpush.msra.mxu0 0.0
        %577 = vmatpush.msra.mxu0 %v560
        %578 = vmatmul.f32.gmra.mxu0 %v554
        %v579 = vpop.f32.mrf.mxu0
        %v580 = vadd.f32 %v552, %v579
        %581 = vmatmul.f32.gmra.mxu0 %v557
        %v582 = vpop.f32.mrf.mxu0
        %v583 = vadd.f32 %v552, %v582
        %584 = vdwg.mxu0
        %v585 = vadd.f32 %v547, %v580
        %v586 = vadd.f32 %v548, %v583
        %587 = vst [vmem:[%s234] sm:$0xff] %v585
        %588 = vst [vmem:[%s234 + $0x8] sm:$0xff] %v586
        %s589 = sand.u32 %s138, 1
        %s590 = scalar_lea.sflag [#allocation4], %s589
        %s591 = sand.u32 %s138, 1
        %s592 = smul.addr %s591, 16
        %s593 = scalar_lea.vmem [#allocation5], %s592
        // Predicated region
        $region45: #{tpu_custom_call.1} parent=39 // pred_check
          %p594 = pneg %p148
        $region46: #{tpu_custom_call.1} parent=39 // pred_check_branch
          %596 = sbr.rel (%p594) target = $region48
        $region47: #{tpu_custom_call.1} parent=39 // pred_region
          %598 = vsyncadd %s590, 0
          %s599 = smul.addr %s20, 2
          %s600 = smul.addr %s599, 8
          %s601 = scalar_lea.hbm %s5, %s600
          %s602 = sshll.u32 %s593, 4
          %s603 = int_to_ptr.vmem [resolvable:$true] %s602
          %s604 = sshll.u32 %s601, 4
          %s605 = int_to_ptr.hbm [resolvable:$true] %s604
          %610 = dma.vmem_to_hbm [thread:$0]  %s603, 256, %s605, %s590, 128, 128, 8
        $region48: #{tpu_custom_call.1} parent=39 // pred_fallthru
          _
      $region40: #{tpu_custom_call.1} parent=5 // pred_fallthru
        _
      %p611 = scmp.le.s32.totalorder 2, %s15
      // Predicated region
      $region49: #{tpu_custom_call.1} parent=5 // pred_check
        %p612 = pneg %p611
      $region50: #{tpu_custom_call.1} parent=5 // pred_check_branch
        %614 = sbr.rel (%p612) target = $region52
      $region51: #{tpu_custom_call.1} parent=5 // pred_region
        %s615 = ssub.s32 %s15, 2
        // Predicated region
        $region53: #{tpu_custom_call.1} parent=51 // pred_check
          %p616 = pneg %p154
        $region54: #{tpu_custom_call.1} parent=51 // pred_check_branch
          %618 = sbr.rel (%p616) target = $region56
        $region55: #{tpu_custom_call.1} parent=51 // pred_region
          %s619 = sand.u32 %s139, 1
          %s620 = scalar_lea.sflag [#allocation4], %s619
          %s621 = sand.u32 %s139, 1
          %s622 = smul.addr %s621, 16
          %s623 = scalar_lea.vmem [#allocation5], %s622
          %625 = dma.done %s620, 256
        $region56: #{tpu_custom_call.1} parent=51 // pred_fallthru
          _
      $region52: #{tpu_custom_call.1} parent=5 // pred_fallthru
        _
    $region6: #{tpu_custom_call.1} parent=1 // loop_footer
      %s19 = sadd.s32 1, %s15
    $region7: #{tpu_custom_call.1} parent=1 // loop_footer_branch
      %14 = sbr.rel target = $region3
    $region8: #{tpu_custom_call.1} parent=1 // loop_exit
      _
    %626 = vsyncpa [#allocation3], 1
    %s627 = scalar_lea.sflag [#allocation3], 1
    %628 = vsyncpa %s627, 1
    %629 = vsyncpa [#allocation4], 1
    %s630 = scalar_lea.sflag [#allocation4], 1
    %631 = vsyncpa %s630, 1

</llo_original>
